<compile_context>
chip_gen: v5e
topology: v5e:2x2
jax: 0.10.0
libtpu: 0.0.40
codegen_flags: <defaults>
</compile_context>

<pallas_src>
import jax
import jax.numpy as jnp
from jax import lax
from jax.experimental import pallas as pl
from jax.experimental.pallas import tpu as pltpu


_VMEM_BUDGET = 32 * 1024 * 1024     # conservative tile-sizing budget (all gens)
_VMEM_LIMIT = 48 * 1024 * 1024      # explicit scoped-VMEM request


def _round_up(n, m):
    return ((n + m - 1) // m) * m


def _choose_tile_b(b, obs, h1, h2, a, tile_b):
    """Pick the batch tile: as large as VMEM allows, >=2 grid steps if possible."""
    b8 = _round_up(max(b, 1), 8)
    # f32 bytes per batch row resident per grid step: double-buffered x, gumbel
    # and the two column outputs, plus the h1/h2/logits/score intermediates.
    per_row = 4 * (2 * obs + 2 * a + 4 + (h1 + h2 + 4 * a))
    weights = 4 * 2 * (obs * h1 + h1 * h2 + h2 * a + h1 + h2 + a)
    cap = max(8, (((_VMEM_BUDGET - weights) // max(per_row, 1)) // 8) * 8)
    tb = min(tile_b, b8, cap)
    # v7x megacore: make sure the parallel batch axis has >= 2 grid steps so
    # both TensorCores get work (no-op when the batch fits in one sublane group).
    if b8 > 8 and pl.cdiv(b8, tb) < 2:
        tb = max(8, _round_up(pl.cdiv(b8, 2), 8))
    return tb


def _pad_rows(arr, b_pad):
    b = arr.shape[0]
    if b == b_pad:
        return arr
    pad = ((0, b_pad - b),) + ((0, 0),) * (arr.ndim - 1)
    return jnp.pad(arr, pad)


def _mlp_log_softmax(x_ref, w1_ref, b1_ref, w2_ref, b2_ref, w3_ref, b3_ref):
    """obs -> hidden1 -> hidden2 -> logits -> log_softmax for one batch tile (f32)."""
    x = x_ref[...]                                                    # (TB, obs)
    h1 = jnp.dot(x, w1_ref[...], preferred_element_type=jnp.float32) + b1_ref[...]
    h1 = jnp.maximum(h1, 0.0)
    h2 = jnp.dot(h1, w2_ref[...], preferred_element_type=jnp.float32) + b2_ref[...]
    h2 = jnp.maximum(h2, 0.0)
    logits = jnp.dot(h2, w3_ref[...], preferred_element_type=jnp.float32) + b3_ref[...]
    # Numerically-stable log-softmax (== Categorical(logits=...) normalization).
    m = jnp.max(logits, axis=-1, keepdims=True)
    lse = m + jnp.log(jnp.sum(jnp.exp(logits - m), axis=-1, keepdims=True))
    return logits - lse                                               # (TB, A) f32


def _sample_kernel(x_ref, g_ref,
                   w1_ref, b1_ref, w2_ref, b2_ref, w3_ref, b3_ref,
                   act_ref, logp_ref):
    logp = _mlp_log_softmax(x_ref, w1_ref, b1_ref, w2_ref, b2_ref, w3_ref, b3_ref)
    tb, a = logp.shape
    idx = lax.broadcasted_iota(jnp.int32, (tb, a), 1)   # built once, reused below

    # Gumbel-max categorical sampling (noise supplied by the wrapper).
    scores = logp + g_ref[...]
    m = jnp.max(scores, axis=-1, keepdims=True)
    act = jnp.min(jnp.where(scores >= m, idx, a), axis=-1, keepdims=True)

    # log_prob of the sampled actions (reuse the same iota).
    onehot = idx == act
    act_ref[...] = act
    logp_ref[...] = jnp.sum(jnp.where(onehot, logp, 0.0), axis=-1, keepdims=True)


def _eval_kernel(x_ref, act_ref,
                 w1_ref, b1_ref, w2_ref, b2_ref, w3_ref, b3_ref,
                 logp_ref):
    logp = _mlp_log_softmax(x_ref, w1_ref, b1_ref, w2_ref, b2_ref, w3_ref, b3_ref)
    tb, a = logp.shape
    idx = lax.broadcasted_iota(jnp.int32, (tb, a), 1)
    onehot = idx == act_ref[...]
    logp_ref[...] = jnp.sum(jnp.where(onehot, logp, 0.0), axis=-1, keepdims=True)


def _cost_estimate(b, obs, h1, h2, a):
    flops = 2 * b * (obs * h1 + h1 * h2 + h2 * a)
    transcendentals = b * a * 2
    bytes_accessed = 4 * (b * obs + b * a               # x + gumbel/actions
                          + obs * h1 + h1 * h2 + h2 * a # weights
                          + h1 + h2 + a                 # biases
                          + 2 * b)                      # outputs
    return pl.CostEstimate(flops=flops, transcendentals=transcendentals,
                           bytes_accessed=bytes_accessed)


def discrete_policy_forward(x, params, key, actions=None, *, tile_b=1024):
    """Mirror of DiscretePolicy.forward: returns (actions, log_prob)."""
    w1, b1, w2, b2, w3, b3 = params
    b, obs = x.shape
    h1, h2, a = w1.shape[1], w2.shape[1], w3.shape[1]

    tb = _choose_tile_b(b, obs, h1, h2, a, tile_b)
    b_pad = _round_up(b, tb)
    grid = (b_pad // tb,)

    xf = _pad_rows(x.astype(jnp.float32), b_pad)

    x_spec = pl.BlockSpec((tb, obs), lambda i: (i, 0))
    g_spec = pl.BlockSpec((tb, a), lambda i: (i, 0))
    col_spec = pl.BlockSpec((tb, 1), lambda i: (i, 0))
    w_specs = [
        pl.BlockSpec((obs, h1), lambda i: (0, 0)),
        pl.BlockSpec((1, h1), lambda i: (0, 0)),
        pl.BlockSpec((h1, h2), lambda i: (0, 0)),
        pl.BlockSpec((1, h2), lambda i: (0, 0)),
        pl.BlockSpec((h2, a), lambda i: (0, 0)),
        pl.BlockSpec((1, a), lambda i: (0, 0)),
    ]
    cparams = pltpu.CompilerParams(dimension_semantics=("parallel",),
                                   vmem_limit_bytes=_VMEM_LIMIT)
    cost = _cost_estimate(b_pad, obs, h1, h2, a)

    if actions is None:
        # Gumbel-max == Categorical(logits).sample(); noise comes from the JAX
        # key (bit-reproducible, works in both Mosaic and interpret modes).
        g = _pad_rows(jax.random.gumbel(key, (b, a), jnp.float32), b_pad)
        act_pad, logp_pad = pl.pallas_call(
            _sample_kernel,
            out_shape=(jax.ShapeDtypeStruct((b_pad, 1), jnp.int32),
                       jax.ShapeDtypeStruct((b_pad, 1), jnp.float32)),
            grid_spec=pltpu.PrefetchScalarGridSpec(
                num_scalar_prefetch=0,
                grid=grid,
                in_specs=[x_spec, g_spec] + w_specs,
                out_specs=(col_spec, col_spec)),
            compiler_params=cparams,
            cost_estimate=cost,
        )(xf, g, w1, b1, w2, b2, w3, b3)
        return act_pad[:b, 0], logp_pad[:b, 0]

    act = actions.astype(jnp.int32)
    act_col = _pad_rows(act[:, None], b_pad)
    logp_pad = pl.pallas_call(
        _eval_kernel,
        out_shape=jax.ShapeDtypeStruct((b_pad, 1), jnp.float32),
        grid_spec=pltpu.PrefetchScalarGridSpec(
            num_scalar_prefetch=0,
            grid=grid,
            in_specs=[x_spec, col_spec] + w_specs,
            out_specs=col_spec),
        compiler_params=cparams,
        cost_estimate=cost,
    )(xf, act_col, w1, b1, w2, b2, w3, b3)
    return act, logp_pad[:b, 0]


def init_params(key, observation_dim, hidden_layers, action_dim):
    dims = [observation_dim] + list(hidden_layers) + [action_dim]
    params = []
    for i in range(len(dims) - 1):
        key, kw, kb = jax.random.split(key, 3)
        fan_in = dims[i]
        scale = 1.0 / jnp.sqrt(jnp.float32(fan_in))
        w = jax.random.uniform(kw, (dims[i], dims[i + 1]), jnp.float32,
                               minval=-scale, maxval=scale)
        bias = jax.random.uniform(kb, (1, dims[i + 1]), jnp.float32,
                                  minval=-scale, maxval=scale)
        params += [w, bias]
    return tuple(params)


def _ref_log_probs(x, params):
    w1, b1, w2, b2, w3, b3 = params
    h1 = jnp.maximum(x @ w1 + b1, 0.0)
    h2 = jnp.maximum(h1 @ w2 + b2, 0.0)
    return jax.nn.log_softmax(h2 @ w3 + b3, axis=-1)


if __name__ == "__main__":
    observation_dim = 32
    hidden_layers = [64, 64]
    action_dim = 8
    batch = 8

    root = jax.random.PRNGKey(0)
    k_param, k_x, k_sample, k_act, k_x2, k_act2 = jax.random.split(root, 6)

    params = init_params(k_param, observation_dim, hidden_layers, action_dim)
    x = jax.random.normal(k_x, (batch, observation_dim), jnp.float32)

    # Path 1: sample actions from the policy (actions=None branch).
    sampled_act, sampled_logp = discrete_policy_forward(x, params, k_sample)
    jax.block_until_ready(sampled_act)
    jax.block_until_ready(sampled_logp)

    # Path 2: evaluate log-prob of provided actions.
    given_actions = jax.random.randint(k_act, (batch,), 0, action_dim)
    act2, logp2 = discrete_policy_forward(x, params, k_sample,
                                          actions=given_actions)
    jax.block_until_ready(logp2)

    ref = _ref_log_probs(x, params)
    rows = jnp.arange(batch)

    assert sampled_act.shape == (batch,)
    assert sampled_logp.shape == (batch,)
    assert bool(jnp.all((sampled_act >= 0) & (sampled_act < action_dim)))
    assert jnp.allclose(sampled_logp, ref[rows, sampled_act], atol=1e-2, rtol=1e-2)
    assert bool(jnp.all(act2 == given_actions))
    assert logp2.shape == (batch,)
    assert jnp.allclose(logp2, ref[rows, given_actions], atol=1e-2, rtol=1e-2)

    # Extra check: batch not a multiple of the tile, multi-step grid + padding.
    batch2 = 20
    x2 = jax.random.normal(k_x2, (batch2, observation_dim), jnp.float32)
    acts2_in = jax.random.randint(k_act2, (batch2,), 0, action_dim)
    s_act, s_logp = discrete_policy_forward(x2, params, k_sample, tile_b=8)
    _, e_logp = discrete_policy_forward(x2, params, k_sample,
                                        actions=acts2_in, tile_b=8)
    jax.block_until_ready(e_logp)
    ref2 = _ref_log_probs(x2, params)
    rows2 = jnp.arange(batch2)
    assert s_act.shape == (batch2,) and s_logp.shape == (batch2,)
    assert bool(jnp.all((s_act >= 0) & (s_act < action_dim)))
    assert jnp.allclose(s_logp, ref2[rows2, s_act], atol=1e-2, rtol=1e-2)
    assert jnp.allclose(e_logp, ref2[rows2, acts2_in], atol=1e-2, rtol=1e-2)

    print("KERNEL_OK")
</pallas_src>

<mosaic_0001>
module attributes {stable_mosaic.version = 11 : i64} {
  func.func @_sample_kernel(%arg0: i32, %arg1: memref<8x32xf32, #tpu.memory_space<vmem>>, %arg2: memref<8x8xf32, #tpu.memory_space<vmem>>, %arg3: memref<32x64xf32, #tpu.memory_space<vmem>>, %arg4: memref<1x64xf32, #tpu.memory_space<vmem>>, %arg5: memref<64x64xf32, #tpu.memory_space<vmem>>, %arg6: memref<1x64xf32, #tpu.memory_space<vmem>>, %arg7: memref<64x8xf32, #tpu.memory_space<vmem>>, %arg8: memref<1x8xf32, #tpu.memory_space<vmem>>, %arg9: memref<8x1xi32, #tpu.memory_space<vmem>>, %arg10: memref<8x1xf32, #tpu.memory_space<vmem>>) attributes {dimension_semantics = [#tpu.dimension_semantics<parallel>], iteration_bounds = array<i64: 1>, scalar_prefetch = 0 : i64, scratch_operands = 0 : i64, tpu.core_type = #tpu.core_type<tc>, window_params = [{transform_indices = @transform_0, window_bounds = array<i64: 8, 32>}, {transform_indices = @transform_1, window_bounds = array<i64: 8, 8>}, {pipeline_mode = #tpu.pipeline_mode<synchronous>, transform_indices = @transform_2, window_bounds = array<i64: 32, 64>}, {pipeline_mode = #tpu.pipeline_mode<synchronous>, transform_indices = @transform_3, window_bounds = array<i64: 1, 64>}, {pipeline_mode = #tpu.pipeline_mode<synchronous>, transform_indices = @transform_4, window_bounds = array<i64: 64, 64>}, {pipeline_mode = #tpu.pipeline_mode<synchronous>, transform_indices = @transform_5, window_bounds = array<i64: 1, 64>}, {pipeline_mode = #tpu.pipeline_mode<synchronous>, transform_indices = @transform_6, window_bounds = array<i64: 64, 8>}, {pipeline_mode = #tpu.pipeline_mode<synchronous>, transform_indices = @transform_7, window_bounds = array<i64: 1, 8>}, {transform_indices = @transform_8, window_bounds = array<i64: 8, 1>}, {transform_indices = @transform_9, window_bounds = array<i64: 8, 1>}]} {
    %c0 = arith.constant 0 : index
    %c0_0 = arith.constant 0 : index
    %0 = vector.load %arg1[%c0, %c0_0] : memref<8x32xf32, #tpu.memory_space<vmem>>, vector<8x32xf32>
    %c0_1 = arith.constant 0 : index
    %c0_2 = arith.constant 0 : index
    %1 = vector.load %arg3[%c0_1, %c0_2] : memref<32x64xf32, #tpu.memory_space<vmem>>, vector<32x64xf32>
    %cst = arith.constant dense<0.000000e+00> : vector<8x64xf32>
    %2 = tpu.matmul %0, %1, %cst {dimension_numbers = #tpu.dot_dimension_numbers<[1], [0], [0], [1], [0, 0, 1, 1], [], []>} : vector<8x32xf32>, vector<32x64xf32>, vector<8x64xf32> -> vector<8x64xf32>
    %c0_3 = arith.constant 0 : index
    %c0_4 = arith.constant 0 : index
    %3 = vector.load %arg4[%c0_3, %c0_4] : memref<1x64xf32, #tpu.memory_space<vmem>>, vector<1x64xf32>
    %4 = vector.broadcast %3 : vector<1x64xf32> to vector<8x64xf32>
    %5 = arith.addf %2, %4 : vector<8x64xf32>
    %cst_5 = arith.constant 0.000000e+00 : f32
    %6 = vector.broadcast %cst_5 : f32 to vector<8x64xf32>
    %7 = arith.maximumf %5, %6 : vector<8x64xf32>
    %c0_6 = arith.constant 0 : index
    %c0_7 = arith.constant 0 : index
    %8 = vector.load %arg5[%c0_6, %c0_7] : memref<64x64xf32, #tpu.memory_space<vmem>>, vector<64x64xf32>
    %cst_8 = arith.constant dense<0.000000e+00> : vector<8x64xf32>
    %9 = tpu.matmul %7, %8, %cst_8 {dimension_numbers = #tpu.dot_dimension_numbers<[1], [0], [0], [1], [0, 0, 1, 1], [], []>} : vector<8x64xf32>, vector<64x64xf32>, vector<8x64xf32> -> vector<8x64xf32>
    %c0_9 = arith.constant 0 : index
    %c0_10 = arith.constant 0 : index
    %10 = vector.load %arg6[%c0_9, %c0_10] : memref<1x64xf32, #tpu.memory_space<vmem>>, vector<1x64xf32>
    %11 = vector.broadcast %10 : vector<1x64xf32> to vector<8x64xf32>
    %12 = arith.addf %9, %11 : vector<8x64xf32>
    %cst_11 = arith.constant 0.000000e+00 : f32
    %13 = vector.broadcast %cst_11 : f32 to vector<8x64xf32>
    %14 = arith.maximumf %12, %13 : vector<8x64xf32>
    %c0_12 = arith.constant 0 : index
    %c0_13 = arith.constant 0 : index
    %15 = vector.load %arg7[%c0_12, %c0_13] : memref<64x8xf32, #tpu.memory_space<vmem>>, vector<64x8xf32>
    %cst_14 = arith.constant dense<0.000000e+00> : vector<8x8xf32>
    %16 = tpu.matmul %14, %15, %cst_14 {dimension_numbers = #tpu.dot_dimension_numbers<[1], [0], [0], [1], [0, 0, 1, 1], [], []>} : vector<8x64xf32>, vector<64x8xf32>, vector<8x8xf32> -> vector<8x8xf32>
    %c0_15 = arith.constant 0 : index
    %c0_16 = arith.constant 0 : index
    %17 = vector.load %arg8[%c0_15, %c0_16] : memref<1x8xf32, #tpu.memory_space<vmem>>, vector<1x8xf32>
    %18 = vector.broadcast %17 : vector<1x8xf32> to vector<8x8xf32>
    %19 = arith.addf %16, %18 : vector<8x8xf32>
    %cst_17 = arith.constant dense<0xFF800000> : vector<8xf32>
    %20 = vector.multi_reduction <maximumf>, %19, %cst_17 [1] : vector<8x8xf32> to vector<8xf32>
    %21 = vector.shape_cast %20 : vector<8xf32> to vector<8x1xf32>
    %22 = vector.broadcast %21 : vector<8x1xf32> to vector<8x8xf32>
    %23 = arith.subf %19, %22 : vector<8x8xf32>
    %24 = math.exp %23 : vector<8x8xf32>
    %cst_18 = arith.constant dense<0.000000e+00> : vector<8xf32>
    %25 = vector.multi_reduction <add>, %24, %cst_18 [1] : vector<8x8xf32> to vector<8xf32>
    %26 = vector.shape_cast %25 : vector<8xf32> to vector<8x1xf32>
    %27 = math.log %26 : vector<8x1xf32>
    %28 = arith.addf %21, %27 : vector<8x1xf32>
    %29 = vector.broadcast %28 : vector<8x1xf32> to vector<8x8xf32>
    %30 = arith.subf %19, %29 : vector<8x8xf32>
    %31 = tpu.iota {dimensions = array<i32: 1>} : vector<8x8xi32>
    %c0_19 = arith.constant 0 : index
    %c0_20 = arith.constant 0 : index
    %32 = vector.load %arg2[%c0_19, %c0_20] : memref<8x8xf32, #tpu.memory_space<vmem>>, vector<8x8xf32>
    %33 = arith.addf %30, %32 : vector<8x8xf32>
    %cst_21 = arith.constant dense<0xFF800000> : vector<8xf32>
    %34 = vector.multi_reduction <maximumf>, %33, %cst_21 [1] : vector<8x8xf32> to vector<8xf32>
    %35 = vector.shape_cast %34 : vector<8xf32> to vector<8x1xf32>
    %36 = vector.broadcast %35 : vector<8x1xf32> to vector<8x8xf32>
    %37 = arith.cmpf oge, %33, %36 : vector<8x8xf32>
    %c8_i32 = arith.constant 8 : i32
    %38 = vector.broadcast %c8_i32 : i32 to vector<8x8xi32>
    %39 = arith.select %37, %31, %38 : vector<8x8xi1>, vector<8x8xi32>
    %cst_22 = arith.constant dense<2147483647> : vector<8xi32>
    %40 = vector.multi_reduction <minsi>, %39, %cst_22 [1] : vector<8x8xi32> to vector<8xi32>
    %41 = vector.shape_cast %40 : vector<8xi32> to vector<8x1xi32>
    %42 = vector.broadcast %41 : vector<8x1xi32> to vector<8x8xi32>
    %43 = arith.cmpi eq, %31, %42 : vector<8x8xi32>
    %c0_23 = arith.constant 0 : index
    %c0_24 = arith.constant 0 : index
    %44 = vector.load %arg9[%c0_23, %c0_24] : memref<8x1xi32, #tpu.memory_space<vmem>>, vector<8x1xi32>
    tpu.vector_store %arg9[%c0_23, %c0_24], %41 {strides = array<i32>} : memref<8x1xi32, #tpu.memory_space<vmem>>, vector<8x1xi32>,
    %cst_25 = arith.constant 0.000000e+00 : f32
    %45 = vector.broadcast %cst_25 : f32 to vector<8x8xf32>
    %46 = arith.select %43, %30, %45 : vector<8x8xi1>, vector<8x8xf32>
    %cst_26 = arith.constant dense<0.000000e+00> : vector<8xf32>
    %47 = vector.multi_reduction <add>, %46, %cst_26 [1] : vector<8x8xf32> to vector<8xf32>
    %48 = vector.shape_cast %47 : vector<8xf32> to vector<8x1xf32>
    %c0_27 = arith.constant 0 : index
    %c0_28 = arith.constant 0 : index
    %49 = vector.load %arg10[%c0_27, %c0_28] : memref<8x1xf32, #tpu.memory_space<vmem>>, vector<8x1xf32>
    tpu.vector_store %arg10[%c0_27, %c0_28], %48 {strides = array<i32>} : memref<8x1xf32, #tpu.memory_space<vmem>>, vector<8x1xf32>,
    return
  }
  func.func @transform_0(%arg0: i32) -> (i32, i32) {
    %c0_i32 = arith.constant 0 : i32
    %c0_i32_0 = arith.constant 0 : i32
    return %arg0, %c0_i32 : i32, i32
  }
  func.func @transform_1(%arg0: i32) -> (i32, i32) {
    %c0_i32 = arith.constant 0 : i32
    %c0_i32_0 = arith.constant 0 : i32
    return %arg0, %c0_i32 : i32, i32
  }
  func.func @transform_2(%arg0: i32) -> (i32, i32) {
    %c0_i32 = arith.constant 0 : i32
    %c0_i32_0 = arith.constant 0 : i32
    %c0_i32_1 = arith.constant 0 : i32
    return %c0_i32, %c0_i32_0 : i32, i32
  }
  func.func @transform_3(%arg0: i32) -> (i32, i32) {
    %c0_i32 = arith.constant 0 : i32
    %c0_i32_0 = arith.constant 0 : i32
    %c0_i32_1 = arith.constant 0 : i32
    return %c0_i32, %c0_i32_0 : i32, i32
  }
  func.func @transform_4(%arg0: i32) -> (i32, i32) {
    %c0_i32 = arith.constant 0 : i32
    %c0_i32_0 = arith.constant 0 : i32
    %c0_i32_1 = arith.constant 0 : i32
    return %c0_i32, %c0_i32_0 : i32, i32
  }
  func.func @transform_5(%arg0: i32) -> (i32, i32) {
    %c0_i32 = arith.constant 0 : i32
    %c0_i32_0 = arith.constant 0 : i32
    %c0_i32_1 = arith.constant 0 : i32
    return %c0_i32, %c0_i32_0 : i32, i32
  }
  func.func @transform_6(%arg0: i32) -> (i32, i32) {
    %c0_i32 = arith.constant 0 : i32
    %c0_i32_0 = arith.constant 0 : i32
    %c0_i32_1 = arith.constant 0 : i32
    return %c0_i32, %c0_i32_0 : i32, i32
  }
  func.func @transform_7(%arg0: i32) -> (i32, i32) {
    %c0_i32 = arith.constant 0 : i32
    %c0_i32_0 = arith.constant 0 : i32
    %c0_i32_1 = arith.constant 0 : i32
    return %c0_i32, %c0_i32_0 : i32, i32
  }
  func.func @transform_8(%arg0: i32) -> (i32, i32) {
    %c0_i32 = arith.constant 0 : i32
    %c0_i32_0 = arith.constant 0 : i32
    return %arg0, %c0_i32 : i32, i32
  }
  func.func @transform_9(%arg0: i32) -> (i32, i32) {
    %c0_i32 = arith.constant 0 : i32
    %c0_i32_0 = arith.constant 0 : i32
    return %arg0, %c0_i32 : i32, i32
  }
}

</mosaic_0001>

<llo_original>
// kernel: tpu_custom_call.1
$region0: #{tpu_custom_call.1}
  #allocation0 [shape = 'u32[]', space=smem, size = 0x4, offset = 0x4, fixed_abs, tag = 'smem constant byte address 0x4 - core index']
  #allocation1 [shape = 'u32[72,128]{1,0:T(1,128)}', space=vmem, size = 0x9000, scoped, tag = 'internal scratch']
  %s0 = inlined_call_operand.vmem [shape: f32[8,32], index: 0, kind: input, shape index: {}]
  %s1 = inlined_call_operand.hbm [shape: f32[8,8], index: 1, kind: input, shape index: {}]
  %s2 = inlined_call_operand.hbm [shape: f32[32,64], index: 2, kind: input, shape index: {}]
  %s3 = inlined_call_operand.vmem [shape: f32[1,64], index: 3, kind: input, shape index: {}]
  %s4 = inlined_call_operand.vmem [shape: f32[64,64], index: 4, kind: input, shape index: {}]
  %s5 = inlined_call_operand.vmem [shape: f32[1,64], index: 5, kind: input, shape index: {}]
  %s6 = inlined_call_operand.vmem [shape: f32[64,8], index: 6, kind: input, shape index: {}]
  %s7 = inlined_call_operand.vmem [shape: f32[1,8], index: 7, kind: input, shape index: {}]
  %s8 = inlined_call_operand.vmem [shape: s32[8,1], index: 8, kind: output, shape index: {0}]
  %s9 = inlined_call_operand.vmem [shape: f32[8,1], index: 9, kind: output, shape index: {1}]
  %10 = xla_tuple %s8, %s9
  %s11 = sld [smem:[#allocation0]]
  $region58: #{tpu_custom_call.1} parent=0
    _
  %s13 = ssub.s32 1, %s11
  %s14 = scalar_select 0, %s13, %s11
  $region1: #{tpu_custom_call.1} parent=0
    #allocation2 [shape = 'u8[4096]{0}', space=vmem, size = 0x1000, scoped, tag = 'input window, operand 1, single buffered']
    #allocation3 [shape = 's32[1]{0}', space=sflag, size = 0x4, scoped, tag = 'scoped memory for tpu_custom_call.1']
    #allocation4 [shape = 'u8[16384]{0}', space=vmem, size = 0x4000, scoped, tag = 'input window, operand 2, single buffered']
    #allocation5 [shape = 's32[1]{0}', space=sflag, size = 0x4, scoped, tag = 'scoped memory for tpu_custom_call.1']
    %15 = vsyncpa [#allocation3], 0
    %16 = vsyncpa [#allocation5], 0
    // Predicated region
    $region2: #{tpu_custom_call.1} parent=1 // pred_check
      _
    $region3: #{tpu_custom_call.1} parent=1 // pred_check_branch
      %18 = sbr.rel (0) target = $region5
    $region4: #{tpu_custom_call.1} parent=1 // pred_region
      _
    $region5: #{tpu_custom_call.1} parent=1 // pred_fallthru
      _
    // Predicated region
    $region6: #{tpu_custom_call.1} parent=1 // pred_check
      _
    $region7: #{tpu_custom_call.1} parent=1 // pred_check_branch
      %20 = sbr.rel (0) target = $region9
    $region8: #{tpu_custom_call.1} parent=1 // pred_region
      %22 = vsyncadd [#allocation3], 0
      %s24 = sshll.u32 %s1, 4
      %s25 = int_to_ptr.hbm [resolvable:$true] %s24
      %s26 = sshll.u32 [#allocation2], 4
      %s27 = int_to_ptr.vmem [resolvable:$true] %s26
      %29 = dma.hbm_to_vmem [thread:$0]  %s25, 128, %s27, [#allocation3]
    $region9: #{tpu_custom_call.1} parent=1 // pred_fallthru
      _
    // Predicated region
    $region10: #{tpu_custom_call.1} parent=1 // pred_check
      _
    $region11: #{tpu_custom_call.1} parent=1 // pred_check_branch
      %31 = sbr.rel (0) target = $region13
    $region12: #{tpu_custom_call.1} parent=1 // pred_region
      %33 = vsyncadd [#allocation5], 0
      %s34 = sshll.u32 %s2, 4
      %s35 = int_to_ptr.hbm [resolvable:$true] %s34
      %s36 = sshll.u32 [#allocation4], 4
      %s37 = int_to_ptr.vmem [resolvable:$true] %s36
      %42 = dma.hbm_to_vmem [thread:$0]  %s35, 512, %s37, [#allocation5], 128, 128, 8
    $region13: #{tpu_custom_call.1} parent=1 // pred_fallthru
      _
    // Predicated region
    $region14: #{tpu_custom_call.1} parent=1 // pred_check
      _
    $region15: #{tpu_custom_call.1} parent=1 // pred_check_branch
      %44 = sbr.rel (0) target = $region17
    $region16: #{tpu_custom_call.1} parent=1 // pred_region
      _
    $region17: #{tpu_custom_call.1} parent=1 // pred_fallthru
      _
    // Predicated region
    $region18: #{tpu_custom_call.1} parent=1 // pred_check
      _
    $region19: #{tpu_custom_call.1} parent=1 // pred_check_branch
      %46 = sbr.rel (0) target = $region21
    $region20: #{tpu_custom_call.1} parent=1 // pred_region
      _
    $region21: #{tpu_custom_call.1} parent=1 // pred_fallthru
      _
    // Predicated region
    $region22: #{tpu_custom_call.1} parent=1 // pred_check
      _
    $region23: #{tpu_custom_call.1} parent=1 // pred_check_branch
      %48 = sbr.rel (0) target = $region25
    $region24: #{tpu_custom_call.1} parent=1 // pred_region
      _
    $region25: #{tpu_custom_call.1} parent=1 // pred_fallthru
      _
    // Predicated region
    $region26: #{tpu_custom_call.1} parent=1 // pred_check
      _
    $region27: #{tpu_custom_call.1} parent=1 // pred_check_branch
      %50 = sbr.rel (0) target = $region29
    $region28: #{tpu_custom_call.1} parent=1 // pred_region
      _
    $region29: #{tpu_custom_call.1} parent=1 // pred_fallthru
      _
    // Predicated region
    $region30: #{tpu_custom_call.1} parent=1 // pred_check
      _
    $region31: #{tpu_custom_call.1} parent=1 // pred_check_branch
      %52 = sbr.rel (0) target = $region33
    $region32: #{tpu_custom_call.1} parent=1 // pred_region
      _
    $region33: #{tpu_custom_call.1} parent=1 // pred_fallthru
      _
    // Predicated region
    $region34: #{tpu_custom_call.1} parent=1 // pred_check
      _
    $region35: #{tpu_custom_call.1} parent=1 // pred_check_branch
      %54 = sbr.rel (0) target = $region37
    $region36: #{tpu_custom_call.1} parent=1 // pred_region
      %56 = dma.done [#allocation3], 128
    $region37: #{tpu_custom_call.1} parent=1 // pred_fallthru
      _
    // Predicated region
    $region38: #{tpu_custom_call.1} parent=1 // pred_check
      _
    $region39: #{tpu_custom_call.1} parent=1 // pred_check_branch
      %58 = sbr.rel (0) target = $region41
    $region40: #{tpu_custom_call.1} parent=1 // pred_region
      %60 = dma.done [#allocation5], 512
    $region41: #{tpu_custom_call.1} parent=1 // pred_fallthru
      _
    %v61 = vld [vmem:[%s0] sm:$0xff]
    %v62 = vld [vmem:[#allocation4] sm:$0xff]
    %v63 = vld [vmem:[#allocation4 + $0x8] sm:$0xff]
    %v64 = vld [vmem:[#allocation4 + $0x10] sm:$0xff]
    %v65 = vld [vmem:[#allocation4 + $0x18] sm:$0xff]
    %v66 = vld [vmem:[%s3] sm:$0x1]
    %v68 = vperm.slane %v66, 0
    %vm70 = vcmask 261120
    %v72 = vsel %vm70, %v61, 0
    %74 = vmatpush.msra.mxu0 0.0
    %75 = vmatpush.msra.mxu0 0.0
    %76 = vmatpush.msra.mxu0 0.0
    %77 = vmatpush.msra.mxu0 0.0
    %78 = vmatpush.msra.mxu0 0.0
    %79 = vmatpush.msra.mxu0 0.0
    %80 = vmatpush.msra.mxu0 0.0
    %81 = vmatpush.msra.mxu0 0.0
    %82 = vmatpush.msra.mxu0 0.0
    %83 = vmatpush.msra.mxu0 0.0
    %84 = vmatpush.msra.mxu0 0.0
    %85 = vmatpush.msra.mxu0 0.0
    %86 = vmatpush.msra.mxu0 %v65
    %87 = vmatpush.msra.mxu0 %v64
    %88 = vmatpush.msra.mxu0 %v63
    %89 = vmatpush.msra.mxu0 %v62
    %90 = vmatmul.f32.gmra.mxu0 %v72
    %v91 = vpop.f32.mrf.mxu0
    %v92 = vadd.f32 %v68, %v91
    %93 = vdwg.mxu0
    %v94 = vmax.f32 %v92, 0.0
    %v95 = vld [vmem:[%s4] sm:$0xff]
    %v96 = vld [vmem:[%s4 + $0x8] sm:$0xff]
    %v97 = vld [vmem:[%s4 + $0x10] sm:$0xff]
    %v98 = vld [vmem:[%s4 + $0x18] sm:$0xff]
    %v99 = vld [vmem:[%s4 + $0x20] sm:$0xff]
    %v100 = vld [vmem:[%s4 + $0x28] sm:$0xff]
    %v101 = vld [vmem:[%s4 + $0x30] sm:$0xff]
    %v102 = vld [vmem:[%s4 + $0x38] sm:$0xff]
    %v103 = vld [vmem:[%s5] sm:$0x1]
    %v105 = vperm.slane %v103, 0
    %vm107 = vcmask 523264
    %v109 = vsel %vm107, %v94, 0
    %111 = vmatpush.msra.mxu0 0.0
    %112 = vmatpush.msra.mxu0 0.0
    %113 = vmatpush.msra.mxu0 0.0
    %114 = vmatpush.msra.mxu0 0.0
    %115 = vmatpush.msra.mxu0 0.0
    %116 = vmatpush.msra.mxu0 0.0
    %117 = vmatpush.msra.mxu0 0.0
    %118 = vmatpush.msra.mxu0 0.0
    %119 = vmatpush.msra.mxu0 %v102
    %120 = vmatpush.msra.mxu0 %v101
    %121 = vmatpush.msra.mxu0 %v100
    %122 = vmatpush.msra.mxu0 %v99
    %123 = vmatpush.msra.mxu0 %v98
    %124 = vmatpush.msra.mxu0 %v97
    %125 = vmatpush.msra.mxu0 %v96
    %126 = vmatpush.msra.mxu0 %v95
    %127 = vmatmul.f32.gmra.mxu0 %v109
    %v128 = vpop.f32.mrf.mxu0
    %v129 = vadd.f32 %v105, %v128
    %130 = vdwg.mxu0
    %v131 = vmax.f32 %v129, 0.0
    %v132 = vld [vmem:[%s6] sm:$0xff]
    %v133 = vld [vmem:[%s6 + $0x8] sm:$0xff]
    %v134 = vld [vmem:[%s6 + $0x10] sm:$0xff]
    %v135 = vld [vmem:[%s6 + $0x18] sm:$0xff]
    %v136 = vld [vmem:[%s6 + $0x20] sm:$0xff]
    %v137 = vld [vmem:[%s6 + $0x28] sm:$0xff]
    %v138 = vld [vmem:[%s6 + $0x30] sm:$0xff]
    %v139 = vld [vmem:[%s6 + $0x38] sm:$0xff]
    %v140 = vld [vmem:[%s7] sm:$0x1]
    %v142 = vperm.slane %v140, 0
    %v145 = vsel %vm107, %v131, 0
    %147 = vmatpush.msra.mxu0 0.0
    %148 = vmatpush.msra.mxu0 0.0
    %149 = vmatpush.msra.mxu0 0.0
    %150 = vmatpush.msra.mxu0 0.0
    %151 = vmatpush.msra.mxu0 0.0
    %152 = vmatpush.msra.mxu0 0.0
    %153 = vmatpush.msra.mxu0 0.0
    %154 = vmatpush.msra.mxu0 0.0
    %155 = vmatpush.msra.mxu0 %v139
    %156 = vmatpush.msra.mxu0 %v138
    %157 = vmatpush.msra.mxu0 %v137
    %158 = vmatpush.msra.mxu0 %v136
    %159 = vmatpush.msra.mxu0 %v135
    %160 = vmatpush.msra.mxu0 %v134
    %161 = vmatpush.msra.mxu0 %v133
    %162 = vmatpush.msra.mxu0 %v132
    %163 = vmatmul.f32.gmra.mxu0 %v145
    %v164 = vpop.f32.mrf.mxu0
    %v165 = vadd.f32 %v142, %v164
    %166 = vdwg.mxu0
    %vm167 = vcmask 64512
    %v168 = vsel %vm167, %v165, -inf
    %169 = vmax.xlane.f32.xlu0 %v168
    %v170 = vpop.xlane.xlu0 %169
    %v171 = vsub.f32 %v165, %v170
    %v172 = vmul.f32 %v171, 1.442695
    %v173 = vpow.pop %v172
    %v174 = vsel %vm167, %v173, 0.0
    %175 = vadd.xlane.f32.xlu0 %v174
    %v176 = vpop.xlane.xlu0 %175
    %v177 = vlog2.pop %v176
    %v178 = vmul.f32 %v177, 0.6931472
    %v179 = vadd.f32 %v170, %v178
    %v180 = vsub.f32 %v165, %v179
    %v181 = vlaneseq
    %v182 = vand.u32 %v181, 127
    %v183 = vld [vmem:[#allocation2] sm:$0xff]
    %v184 = vadd.f32 %v180, %v183
    %v185 = vsel %vm167, %v184, -inf
    %186 = vmax.xlane.f32.xlu0 %v185
    %v187 = vpop.xlane.xlu0 %186
    %vm188 = vcmp.ge.f32.partialorder %v184, %v187
    %v189 = vsel %vm188, %v182, 8
    %v190 = vsel %vm167, %v189, 2147483647
    %v191 = vand.u32 %v190, 65535
    %v192 = vshra.s32 %v190, 16
    %v193 = vcvt.s32.f32 %v191
    %v194 = vcvt.s32.f32 %v192
    %195 = vmin.xlane.f32.xlu0 %v194
    %v196 = vpop.xlane.xlu0 %195
    %vm197 = vcmp.eq.f32.partialorder %v194, %v196
    %v198 = vsel %vm197, %v193, inf
    %199 = vmin.xlane.f32.xlu0 %v198
    %v200 = vpop.xlane.xlu0 %199
    %v201 = vcvt.f32.s32 %v200
    %v202 = vcvt.f32.s32 %v196
    %v203 = vshll.u32 %v202, 16
    %v204 = vadd.s32 %v203, %v201
    %vm205 = vcmp.eq.s32.totalorder %v182, %v204
    %vm206 = vcmask 7168
    %207 = vst.msk [vmem:[%s8] sm:$0xff] %vm206, %v204
    %v208 = vsel %vm205, %v180, 0.0
    %v209 = vsel %vm167, %v208, 0.0
    %210 = vadd.xlane.f32.xlu0 %v209
    %v211 = vpop.xlane.xlu0 %210
    %212 = vst.msk [vmem:[%s9] sm:$0xff] %vm206, %v211
    // Predicated region
    $region42: #{tpu_custom_call.1} parent=1 // pred_check
      _
    $region43: #{tpu_custom_call.1} parent=1 // pred_check_branch
      %214 = sbr.rel (0) target = $region45
    $region44: #{tpu_custom_call.1} parent=1 // pred_region
      _
    $region45: #{tpu_custom_call.1} parent=1 // pred_fallthru
      _
    // Predicated region
    $region46: #{tpu_custom_call.1} parent=1 // pred_check
      _
    $region47: #{tpu_custom_call.1} parent=1 // pred_check_branch
      %216 = sbr.rel (0) target = $region49
    $region48: #{tpu_custom_call.1} parent=1 // pred_region
      _
    $region49: #{tpu_custom_call.1} parent=1 // pred_fallthru
      _
    // Predicated region
    $region50: #{tpu_custom_call.1} parent=1 // pred_check
      _
    $region51: #{tpu_custom_call.1} parent=1 // pred_check_branch
      %218 = sbr.rel (0) target = $region53
    $region52: #{tpu_custom_call.1} parent=1 // pred_region
      _
    $region53: #{tpu_custom_call.1} parent=1 // pred_fallthru
      _
    // Predicated region
    $region54: #{tpu_custom_call.1} parent=1 // pred_check
      _
    $region55: #{tpu_custom_call.1} parent=1 // pred_check_branch
      %220 = sbr.rel (0) target = $region57
    $region56: #{tpu_custom_call.1} parent=1 // pred_region
      _
    $region57: #{tpu_custom_call.1} parent=1 // pred_fallthru
      _
    %221 = vsyncpa [#allocation3], 1
    %222 = vsyncpa [#allocation5], 1

</llo_original>
